<compile_context>
chip_gen: v6e
topology: v6e:2x2x1
jax: 0.10.0
libtpu: 0.0.40
codegen_flags: <defaults>
</compile_context>

<pallas_src>
import functools

import numpy as np
import jax
import jax.numpy as jnp
from jax.experimental import pallas as pl
from jax.experimental.pallas import tpu as pltpu

_VMEM = pl.BlockSpec(memory_space=pltpu.MemorySpace.VMEM)


# ---------------------------------------------------------------------------
# Fused kernel: pre-net + fused bidirectional GRU + pooling + scorer
# ---------------------------------------------------------------------------
def _little_kernel(src2_ref, w1_ref, b1_ref, wih_ref, bih_ref, whh_ref, bhh_ref,
                   pool_ref, sw1t_ref, sb1_ref, sw2t_ref, sb2_ref,
                   score_ref, *, L, Bp, F):
    f32 = jnp.float32
    F2, F4, F6 = 2 * F, 4 * F, 6 * F

    # --- pre-net (BN -> Linear -> BN folded into w1/b1) + Tanh; Dropout = identity.
    #     src2 row t*Bp+b carries [x(b, t) | x(b, L-1-t)]; w1 is block-diagonal so the
    #     two lane halves stay independent.
    y = jnp.tanh(jnp.dot(src2_ref[...], w1_ref[...], preferred_element_type=f32)
                 + b1_ref[...])                                   # (L*Bp, 2F)

    # --- hoisted input-side gates for BOTH directions and ALL timesteps: one matmul.
    #     column layout: [r_f r_b z_f z_b n_f n_b], each F wide.
    gi = jnp.dot(y, wih_ref[...], preferred_element_type=f32) + bih_ref[...]   # (L*Bp, 6F)

    whh = whh_ref[...]                                            # (2F, 6F) block-diag
    bhh = bhh_ref[...]                                            # (1, 6F)

    h = jnp.zeros((Bp, F2), f32)                                  # [h_fwd | h_bwd]
    total = jnp.zeros((Bp, F2), f32)
    sl_f = h[:, 0:F]
    sl_b = h[:, F:F2]

    # fully unrolled recurrence (L static & small); fwd/bwd fused into one dot per step.
    for s in range(L):
        g = gi[s * Bp:(s + 1) * Bp, :]                            # aligned (Bp, 6F) view
        gh = jnp.dot(h, whh, preferred_element_type=f32) + bhh    # one fused MXU dot
        rz = jax.nn.sigmoid(g[:, 0:F4] + gh[:, 0:F4])             # [r_f r_b z_f z_b]
        r = rz[:, 0:F2]
        z = rz[:, F2:F4]
        n = jnp.tanh(g[:, F4:F6] + r * gh[:, F4:F6])              # [n_f n_b]
        h = (1.0 - z) * n + z * h
        total = total + h
        if s == 0:
            sl_f = h[:, 0:F]            # fwd state at time 0   (selfloop, fwd half)
        if s == L - 1:
            sl_b = h[:, F:F2]           # bwd state at time 0   (selfloop, bwd half)

    sl = jnp.concatenate([sl_f, sl_b], axis=1)                    # (Bp, 2F)
    inv_rest = 1.0 / max(L - 1, 1)
    rest = (total - sl) * inv_rest                                # mean over t >= 1
    feat = jnp.concatenate([sl, rest], axis=1)                    # (Bp, 4F)

    # --- head: ONE contraction against sw1^T, then path-mean pooling via the (G, Bp)
    #     pool matrix (padded columns are exactly 0), bias + tanh, final scorer.
    pre = jnp.dot(feat, sw1t_ref[...], preferred_element_type=f32)            # (Bp, H)
    hh = jnp.tanh(jnp.dot(pool_ref[...], pre, preferred_element_type=f32)
                  + sb1_ref[...])                                             # (G, H)
    score_ref[...] = (jnp.dot(hh, sw2t_ref[...], preferred_element_type=f32)
                      + sb2_ref[...])                                         # (G, 1)


# ---------------------------------------------------------------------------
# Wrapper: fold BNs, pack/fuse weights, t-major + padded relayout (no perm matmul)
# ---------------------------------------------------------------------------
def _fuse_gate_weights(wt_f, wt_b, F):
    """wt_* : (F, 3F) with columns [r|z|n].  Returns (2F, 6F) block-diagonal weight with
    columns [r_f r_b z_f z_b n_f n_b] (fwd rows on top, bwd rows on bottom)."""
    out = jnp.zeros((2 * F, 6 * F), jnp.float32)
    for g in range(3):
        out = out.at[0:F, (2 * g) * F:(2 * g + 1) * F].set(wt_f[:, g * F:(g + 1) * F])
        out = out.at[F:2 * F, (2 * g + 1) * F:(2 * g + 2) * F].set(wt_b[:, g * F:(g + 1) * F])
    return out


def _fuse_gate_bias(b_f, b_b, F):
    parts = []
    for g in range(3):
        parts.append(b_f[g * F:(g + 1) * F])
        parts.append(b_b[g * F:(g + 1) * F])
    return jnp.concatenate(parts).reshape(1, -1)


def _little_forward(src, p, *, F, L, P, G):
    B = G * P
    Bp = (B + 7) // 8 * 8                 # pad paths to a sublane multiple
    eps = 1e-5
    f32 = jnp.float32

    # fold BatchNorm(eval) -> Linear -> BatchNorm(eval) into a single affine (w1f, b1f)
    s1 = p['bn1_gamma'] / jnp.sqrt(p['bn1_var'] + eps)
    t1 = p['bn1_beta'] - p['bn1_mean'] * s1
    s2 = p['bn2_gamma'] / jnp.sqrt(p['bn2_var'] + eps)
    t2 = p['bn2_beta'] - p['bn2_mean'] * s2
    w1f = (s1[:, None] * p['w1'].T) * s2[None, :]                       # (F, F)
    b1f = (t1 @ p['w1'].T + p['b1']) * s2 + t2                          # (F,)

    # block-diagonal pre-net affine so the [x_t | x_{L-1-t}] lane halves stay independent
    w1_bd = jnp.zeros((2 * F, 2 * F), f32)
    w1_bd = w1_bd.at[0:F, 0:F].set(w1f).at[F:2 * F, F:2 * F].set(w1f)
    b1_bd = jnp.concatenate([b1f, b1f]).reshape(1, -1)                  # (1, 2F)

    # fused (block-diagonal, gate-reordered) GRU weights
    wih_bd = _fuse_gate_weights(p['wih_f'].T, p['wih_b'].T, F)          # (2F, 6F)
    bih_bd = _fuse_gate_bias(p['bih_f'], p['bih_b'], F)                 # (1, 6F)
    whh_bd = _fuse_gate_weights(p['whh_f'].T, p['whh_b'].T, F)          # (2F, 6F)
    bhh_bd = _fuse_gate_bias(p['bhh_f'], p['bhh_b'], F)                 # (1, 6F)

    # b-major -> t-major relayout + zero-pad B -> Bp + time-reversed copy for the bwd
    # direction, all done here (fused XLA transpose/concat) instead of an in-kernel
    # (N,N) permutation matmul.
    src3 = src.reshape(B, L, F)
    src3 = jnp.pad(src3, ((0, Bp - B), (0, 0), (0, 0)))
    src_t = jnp.transpose(src3, (1, 0, 2))                              # (L, Bp, F)
    src_r = src_t[::-1]                                                 # time-reversed
    src2 = jnp.concatenate([src_t, src_r], axis=-1).reshape(L * Bp, 2 * F)

    # per-group path-mean matrix; padded path columns are exactly 0 so the nonzero GRU
    # states of padded sequences never reach the scorer.
    pool = np.zeros((G, Bp), np.float32)
    for g in range(G):
        pool[g, g * P:(g + 1) * P] = 1.0 / P

    kernel = functools.partial(_little_kernel, L=L, Bp=Bp, F=F)
    return pl.pallas_call(
        kernel,
        out_shape=jax.ShapeDtypeStruct((G, 1), f32),
        in_specs=[_VMEM] * 12,
        out_specs=_VMEM,
    )(src2, w1_bd, b1_bd, wih_bd, bih_bd, whh_bd, bhh_bd,
      jnp.asarray(pool), p['sw1'].T, p['sb1'].reshape(1, -1),
      p['sw2'].T, p['sb2'].reshape(1, -1))


little_forward = jax.jit(_little_forward, static_argnames=("F", "L", "P", "G"))


# ---------------------------------------------------------------------------
# Pure-JAX reference (mirrors PyTorch semantics, eval mode) for verification
# ---------------------------------------------------------------------------
def reference_forward(src, p, *, F, L, P, G):
    eps = 1e-5
    x = (src - p['bn1_mean']) / jnp.sqrt(p['bn1_var'] + eps) * p['bn1_gamma'] + p['bn1_beta']
    x = x @ p['w1'].T + p['b1']
    x = (x - p['bn2_mean']) / jnp.sqrt(p['bn2_var'] + eps) * p['bn2_gamma'] + p['bn2_beta']
    x = jnp.tanh(x)
    B = G * P
    x = x.reshape(B, L, F).transpose(1, 0, 2)               # (L, B, F)

    def gru_dir(wih, whh, bih, bhh, reverse):
        h = jnp.zeros((B, F), jnp.float32)
        outs = [None] * L
        order = range(L - 1, -1, -1) if reverse else range(L)
        for t in order:
            gi = x[t] @ wih.T + bih
            gh = h @ whh.T + bhh
            r = jax.nn.sigmoid(gi[:, :F] + gh[:, :F])
            z = jax.nn.sigmoid(gi[:, F:2 * F] + gh[:, F:2 * F])
            n = jnp.tanh(gi[:, 2 * F:] + r * gh[:, 2 * F:])
            h = (1.0 - z) * n + z * h
            outs[t] = h
        return jnp.stack(outs)

    of = gru_dir(p['wih_f'], p['whh_f'], p['bih_f'], p['bhh_f'], False)
    ob = gru_dir(p['wih_b'], p['whh_b'], p['bih_b'], p['bhh_b'], True)
    outs = jnp.concatenate([of, ob], axis=-1)               # (L, B, 2F)

    pooled = outs.reshape(L, G, P, 2 * F).mean(axis=2)      # (L, G, 2F)
    selfloop = pooled[0]
    rest = pooled[1:].mean(axis=0)
    feat = jnp.concatenate([selfloop, rest], axis=1)        # (G, 4F)
    h = jnp.tanh(feat @ p['sw1'].T + p['sb1'])
    return h @ p['sw2'].T + p['sb2']


# ---------------------------------------------------------------------------
if __name__ == "__main__":
    # args.* : d_e=8, d_h=16, path_length=4, num_paths=3, dropout (inactive in eval)
    F, H, L, P, G = 8, 16, 4, 3, 2
    B = G * P            # sequences fed to the GRU
    N = B * L            # rows of the flat input src

    key = jax.random.PRNGKey(0)
    ks = iter(jax.random.split(key, 32))

    def uni(shape, scale):
        return jax.random.uniform(next(ks), shape, jnp.float32, -scale, scale)

    lin_s = 1.0 / jnp.sqrt(jnp.float32(F))
    gru_s = 1.0 / jnp.sqrt(jnp.float32(F))
    sia1_s = 1.0 / jnp.sqrt(jnp.float32(4 * F))
    sia2_s = 1.0 / jnp.sqrt(jnp.float32(H))

    params = dict(
        # BatchNorm1d(nfeat) before "first"
        bn1_gamma=1.0 + 0.1 * jax.random.normal(next(ks), (F,), jnp.float32),
        bn1_beta=0.1 * jax.random.normal(next(ks), (F,), jnp.float32),
        bn1_mean=0.1 * jax.random.normal(next(ks), (F,), jnp.float32),
        bn1_var=jax.random.uniform(next(ks), (F,), jnp.float32, 0.5, 1.5),
        # first = Linear(F, F) + BatchNorm1d(F) + Tanh + Dropout
        w1=uni((F, F), lin_s),
        b1=uni((F,), lin_s),
        bn2_gamma=1.0 + 0.1 * jax.random.normal(next(ks), (F,), jnp.float32),
        bn2_beta=0.1 * jax.random.normal(next(ks), (F,), jnp.float32),
        bn2_mean=0.1 * jax.random.normal(next(ks), (F,), jnp.float32),
        bn2_var=jax.random.uniform(next(ks), (F,), jnp.float32, 0.5, 1.5),
        # GRU(input=F, hidden=F, bidirectional): forward + reverse directions
        wih_f=uni((3 * F, F), gru_s), whh_f=uni((3 * F, F), gru_s),
        bih_f=uni((3 * F,), gru_s),   bhh_f=uni((3 * F,), gru_s),
        wih_b=uni((3 * F, F), gru_s), whh_b=uni((3 * F, F), gru_s),
        bih_b=uni((3 * F,), gru_s),   bhh_b=uni((3 * F,), gru_s),
        # SiameseNet(4F) scorer (see TODO at top)
        sw1=uni((H, 4 * F), sia1_s), sb1=uni((H,), sia1_s),
        sw2=uni((1, H), sia2_s),     sb2=uni((1,), sia2_s),
    )

    src = jax.random.normal(next(ks), (N, F), jnp.float32)

    score = little_forward(src, params, F=F, L=L, P=P, G=G)
    score = jax.block_until_ready(score)

    ref = reference_forward(src, params, F=F, L=L, P=P, G=G)
    assert score.shape == (G, 1), score.shape
    assert jnp.allclose(score, ref, rtol=1e-4, atol=1e-4), (score, ref)

    print("KERNEL_OK")
</pallas_src>

<mosaic_0001>
module attributes {stable_mosaic.version = 11 : i64} {
  func.func @_little_kernel(%arg0: memref<32x16xf32, #tpu.memory_space<vmem>>, %arg1: memref<16x16xf32, #tpu.memory_space<vmem>>, %arg2: memref<1x16xf32, #tpu.memory_space<vmem>>, %arg3: memref<16x48xf32, #tpu.memory_space<vmem>>, %arg4: memref<1x48xf32, #tpu.memory_space<vmem>>, %arg5: memref<16x48xf32, #tpu.memory_space<vmem>>, %arg6: memref<1x48xf32, #tpu.memory_space<vmem>>, %arg7: memref<2x8xf32, #tpu.memory_space<vmem>>, %arg8: memref<32x16xf32, #tpu.memory_space<vmem>>, %arg9: memref<1x16xf32, #tpu.memory_space<vmem>>, %arg10: memref<16x1xf32, #tpu.memory_space<vmem>>, %arg11: memref<1x1xf32, #tpu.memory_space<vmem>>, %arg12: memref<2x1xf32, #tpu.memory_space<vmem>>) attributes {dimension_semantics = [], scalar_prefetch = 0 : i64, scratch_operands = 0 : i64, tpu.core_type = #tpu.core_type<tc>} {
    %c0 = arith.constant 0 : index
    %c0_0 = arith.constant 0 : index
    %0 = vector.load %arg0[%c0, %c0_0] : memref<32x16xf32, #tpu.memory_space<vmem>>, vector<32x16xf32>
    %c0_1 = arith.constant 0 : index
    %c0_2 = arith.constant 0 : index
    %1 = vector.load %arg1[%c0_1, %c0_2] : memref<16x16xf32, #tpu.memory_space<vmem>>, vector<16x16xf32>
    %cst = arith.constant dense<0.000000e+00> : vector<32x16xf32>
    %2 = tpu.matmul %0, %1, %cst {dimension_numbers = #tpu.dot_dimension_numbers<[1], [0], [0], [1], [0, 0, 1, 1], [], []>} : vector<32x16xf32>, vector<16x16xf32>, vector<32x16xf32> -> vector<32x16xf32>
    %c0_3 = arith.constant 0 : index
    %c0_4 = arith.constant 0 : index
    %3 = vector.load %arg2[%c0_3, %c0_4] : memref<1x16xf32, #tpu.memory_space<vmem>>, vector<1x16xf32>
    %4 = vector.broadcast %3 : vector<1x16xf32> to vector<32x16xf32>
    %5 = arith.addf %2, %4 : vector<32x16xf32>
    %6 = math.tanh %5 : vector<32x16xf32>
    %c0_5 = arith.constant 0 : index
    %c0_6 = arith.constant 0 : index
    %7 = vector.load %arg3[%c0_5, %c0_6] : memref<16x48xf32, #tpu.memory_space<vmem>>, vector<16x48xf32>
    %cst_7 = arith.constant dense<0.000000e+00> : vector<32x48xf32>
    %8 = tpu.matmul %6, %7, %cst_7 {dimension_numbers = #tpu.dot_dimension_numbers<[1], [0], [0], [1], [0, 0, 1, 1], [], []>} : vector<32x16xf32>, vector<16x48xf32>, vector<32x48xf32> -> vector<32x48xf32>
    %c0_8 = arith.constant 0 : index
    %c0_9 = arith.constant 0 : index
    %9 = vector.load %arg4[%c0_8, %c0_9] : memref<1x48xf32, #tpu.memory_space<vmem>>, vector<1x48xf32>
    %10 = vector.broadcast %9 : vector<1x48xf32> to vector<32x48xf32>
    %11 = arith.addf %8, %10 : vector<32x48xf32>
    %c0_10 = arith.constant 0 : index
    %c0_11 = arith.constant 0 : index
    %12 = vector.load %arg5[%c0_10, %c0_11] : memref<16x48xf32, #tpu.memory_space<vmem>>, vector<16x48xf32>
    %c0_12 = arith.constant 0 : index
    %c0_13 = arith.constant 0 : index
    %13 = vector.load %arg6[%c0_12, %c0_13] : memref<1x48xf32, #tpu.memory_space<vmem>>, vector<1x48xf32>
    %cst_14 = arith.constant 0.000000e+00 : f32
    %14 = vector.broadcast %cst_14 : f32 to vector<8x16xf32>
    %cst_15 = arith.constant 0.000000e+00 : f32
    %15 = vector.broadcast %cst_15 : f32 to vector<8x16xf32>
    %16 = vector.extract_strided_slice %11 {offsets = [0, 0], sizes = [8, 48], strides = [1, 1]} : vector<32x48xf32> to vector<8x48xf32>
    %cst_16 = arith.constant dense<0.000000e+00> : vector<8x48xf32>
    %17 = tpu.matmul %14, %12, %cst_16 {dimension_numbers = #tpu.dot_dimension_numbers<[1], [0], [0], [1], [0, 0, 1, 1], [], []>} : vector<8x16xf32>, vector<16x48xf32>, vector<8x48xf32> -> vector<8x48xf32>
    %18 = vector.broadcast %13 : vector<1x48xf32> to vector<8x48xf32>
    %19 = arith.addf %17, %18 : vector<8x48xf32>
    %20 = vector.extract_strided_slice %16 {offsets = [0, 0], sizes = [8, 32], strides = [1, 1]} : vector<8x48xf32> to vector<8x32xf32>
    %21 = vector.extract_strided_slice %19 {offsets = [0, 0], sizes = [8, 32], strides = [1, 1]} : vector<8x48xf32> to vector<8x32xf32>
    %22 = arith.addf %20, %21 : vector<8x32xf32>
    %23 = arith.negf %22 : vector<8x32xf32>
    %24 = math.exp %23 : vector<8x32xf32>
    %cst_17 = arith.constant 1.000000e+00 : f32
    %25 = vector.broadcast %cst_17 : f32 to vector<8x32xf32>
    %26 = arith.addf %25, %24 : vector<8x32xf32>
    %27 = arith.divf %25, %26 : vector<8x32xf32>
    %28 = vector.extract_strided_slice %27 {offsets = [0, 0], sizes = [8, 16], strides = [1, 1]} : vector<8x32xf32> to vector<8x16xf32>
    %29 = vector.extract_strided_slice %27 {offsets = [0, 16], sizes = [8, 16], strides = [1, 1]} : vector<8x32xf32> to vector<8x16xf32>
    %30 = vector.extract_strided_slice %16 {offsets = [0, 32], sizes = [8, 16], strides = [1, 1]} : vector<8x48xf32> to vector<8x16xf32>
    %31 = vector.extract_strided_slice %19 {offsets = [0, 32], sizes = [8, 16], strides = [1, 1]} : vector<8x48xf32> to vector<8x16xf32>
    %32 = arith.mulf %28, %31 : vector<8x16xf32>
    %33 = arith.addf %30, %32 : vector<8x16xf32>
    %34 = math.tanh %33 : vector<8x16xf32>
    %cst_18 = arith.constant 1.000000e+00 : f32
    %35 = vector.broadcast %cst_18 : f32 to vector<8x16xf32>
    %36 = arith.subf %35, %29 : vector<8x16xf32>
    %37 = arith.mulf %36, %34 : vector<8x16xf32>
    %38 = arith.mulf %29, %14 : vector<8x16xf32>
    %39 = arith.addf %37, %38 : vector<8x16xf32>
    %40 = arith.addf %15, %39 : vector<8x16xf32>
    %41 = vector.extract_strided_slice %39 {offsets = [0, 0], sizes = [8, 8], strides = [1, 1]} : vector<8x16xf32> to vector<8x8xf32>
    %42 = vector.extract_strided_slice %11 {offsets = [8, 0], sizes = [8, 48], strides = [1, 1]} : vector<32x48xf32> to vector<8x48xf32>
    %cst_19 = arith.constant dense<0.000000e+00> : vector<8x48xf32>
    %43 = tpu.matmul %39, %12, %cst_19 {dimension_numbers = #tpu.dot_dimension_numbers<[1], [0], [0], [1], [0, 0, 1, 1], [], []>} : vector<8x16xf32>, vector<16x48xf32>, vector<8x48xf32> -> vector<8x48xf32>
    %44 = vector.broadcast %13 : vector<1x48xf32> to vector<8x48xf32>
    %45 = arith.addf %43, %44 : vector<8x48xf32>
    %46 = vector.extract_strided_slice %42 {offsets = [0, 0], sizes = [8, 32], strides = [1, 1]} : vector<8x48xf32> to vector<8x32xf32>
    %47 = vector.extract_strided_slice %45 {offsets = [0, 0], sizes = [8, 32], strides = [1, 1]} : vector<8x48xf32> to vector<8x32xf32>
    %48 = arith.addf %46, %47 : vector<8x32xf32>
    %49 = arith.negf %48 : vector<8x32xf32>
    %50 = math.exp %49 : vector<8x32xf32>
    %cst_20 = arith.constant 1.000000e+00 : f32
    %51 = vector.broadcast %cst_20 : f32 to vector<8x32xf32>
    %52 = arith.addf %51, %50 : vector<8x32xf32>
    %53 = arith.divf %51, %52 : vector<8x32xf32>
    %54 = vector.extract_strided_slice %53 {offsets = [0, 0], sizes = [8, 16], strides = [1, 1]} : vector<8x32xf32> to vector<8x16xf32>
    %55 = vector.extract_strided_slice %53 {offsets = [0, 16], sizes = [8, 16], strides = [1, 1]} : vector<8x32xf32> to vector<8x16xf32>
    %56 = vector.extract_strided_slice %42 {offsets = [0, 32], sizes = [8, 16], strides = [1, 1]} : vector<8x48xf32> to vector<8x16xf32>
    %57 = vector.extract_strided_slice %45 {offsets = [0, 32], sizes = [8, 16], strides = [1, 1]} : vector<8x48xf32> to vector<8x16xf32>
    %58 = arith.mulf %54, %57 : vector<8x16xf32>
    %59 = arith.addf %56, %58 : vector<8x16xf32>
    %60 = math.tanh %59 : vector<8x16xf32>
    %cst_21 = arith.constant 1.000000e+00 : f32
    %61 = vector.broadcast %cst_21 : f32 to vector<8x16xf32>
    %62 = arith.subf %61, %55 : vector<8x16xf32>
    %63 = arith.mulf %62, %60 : vector<8x16xf32>
    %64 = arith.mulf %55, %39 : vector<8x16xf32>
    %65 = arith.addf %63, %64 : vector<8x16xf32>
    %66 = arith.addf %40, %65 : vector<8x16xf32>
    %67 = vector.extract_strided_slice %11 {offsets = [16, 0], sizes = [8, 48], strides = [1, 1]} : vector<32x48xf32> to vector<8x48xf32>
    %cst_22 = arith.constant dense<0.000000e+00> : vector<8x48xf32>
    %68 = tpu.matmul %65, %12, %cst_22 {dimension_numbers = #tpu.dot_dimension_numbers<[1], [0], [0], [1], [0, 0, 1, 1], [], []>} : vector<8x16xf32>, vector<16x48xf32>, vector<8x48xf32> -> vector<8x48xf32>
    %69 = vector.broadcast %13 : vector<1x48xf32> to vector<8x48xf32>
    %70 = arith.addf %68, %69 : vector<8x48xf32>
    %71 = vector.extract_strided_slice %67 {offsets = [0, 0], sizes = [8, 32], strides = [1, 1]} : vector<8x48xf32> to vector<8x32xf32>
    %72 = vector.extract_strided_slice %70 {offsets = [0, 0], sizes = [8, 32], strides = [1, 1]} : vector<8x48xf32> to vector<8x32xf32>
    %73 = arith.addf %71, %72 : vector<8x32xf32>
    %74 = arith.negf %73 : vector<8x32xf32>
    %75 = math.exp %74 : vector<8x32xf32>
    %cst_23 = arith.constant 1.000000e+00 : f32
    %76 = vector.broadcast %cst_23 : f32 to vector<8x32xf32>
    %77 = arith.addf %76, %75 : vector<8x32xf32>
    %78 = arith.divf %76, %77 : vector<8x32xf32>
    %79 = vector.extract_strided_slice %78 {offsets = [0, 0], sizes = [8, 16], strides = [1, 1]} : vector<8x32xf32> to vector<8x16xf32>
    %80 = vector.extract_strided_slice %78 {offsets = [0, 16], sizes = [8, 16], strides = [1, 1]} : vector<8x32xf32> to vector<8x16xf32>
    %81 = vector.extract_strided_slice %67 {offsets = [0, 32], sizes = [8, 16], strides = [1, 1]} : vector<8x48xf32> to vector<8x16xf32>
    %82 = vector.extract_strided_slice %70 {offsets = [0, 32], sizes = [8, 16], strides = [1, 1]} : vector<8x48xf32> to vector<8x16xf32>
    %83 = arith.mulf %79, %82 : vector<8x16xf32>
    %84 = arith.addf %81, %83 : vector<8x16xf32>
    %85 = math.tanh %84 : vector<8x16xf32>
    %cst_24 = arith.constant 1.000000e+00 : f32
    %86 = vector.broadcast %cst_24 : f32 to vector<8x16xf32>
    %87 = arith.subf %86, %80 : vector<8x16xf32>
    %88 = arith.mulf %87, %85 : vector<8x16xf32>
    %89 = arith.mulf %80, %65 : vector<8x16xf32>
    %90 = arith.addf %88, %89 : vector<8x16xf32>
    %91 = arith.addf %66, %90 : vector<8x16xf32>
    %92 = vector.extract_strided_slice %11 {offsets = [24, 0], sizes = [8, 48], strides = [1, 1]} : vector<32x48xf32> to vector<8x48xf32>
    %cst_25 = arith.constant dense<0.000000e+00> : vector<8x48xf32>
    %93 = tpu.matmul %90, %12, %cst_25 {dimension_numbers = #tpu.dot_dimension_numbers<[1], [0], [0], [1], [0, 0, 1, 1], [], []>} : vector<8x16xf32>, vector<16x48xf32>, vector<8x48xf32> -> vector<8x48xf32>
    %94 = vector.broadcast %13 : vector<1x48xf32> to vector<8x48xf32>
    %95 = arith.addf %93, %94 : vector<8x48xf32>
    %96 = vector.extract_strided_slice %92 {offsets = [0, 0], sizes = [8, 32], strides = [1, 1]} : vector<8x48xf32> to vector<8x32xf32>
    %97 = vector.extract_strided_slice %95 {offsets = [0, 0], sizes = [8, 32], strides = [1, 1]} : vector<8x48xf32> to vector<8x32xf32>
    %98 = arith.addf %96, %97 : vector<8x32xf32>
    %99 = arith.negf %98 : vector<8x32xf32>
    %100 = math.exp %99 : vector<8x32xf32>
    %cst_26 = arith.constant 1.000000e+00 : f32
    %101 = vector.broadcast %cst_26 : f32 to vector<8x32xf32>
    %102 = arith.addf %101, %100 : vector<8x32xf32>
    %103 = arith.divf %101, %102 : vector<8x32xf32>
    %104 = vector.extract_strided_slice %103 {offsets = [0, 0], sizes = [8, 16], strides = [1, 1]} : vector<8x32xf32> to vector<8x16xf32>
    %105 = vector.extract_strided_slice %103 {offsets = [0, 16], sizes = [8, 16], strides = [1, 1]} : vector<8x32xf32> to vector<8x16xf32>
    %106 = vector.extract_strided_slice %92 {offsets = [0, 32], sizes = [8, 16], strides = [1, 1]} : vector<8x48xf32> to vector<8x16xf32>
    %107 = vector.extract_strided_slice %95 {offsets = [0, 32], sizes = [8, 16], strides = [1, 1]} : vector<8x48xf32> to vector<8x16xf32>
    %108 = arith.mulf %104, %107 : vector<8x16xf32>
    %109 = arith.addf %106, %108 : vector<8x16xf32>
    %110 = math.tanh %109 : vector<8x16xf32>
    %cst_27 = arith.constant 1.000000e+00 : f32
    %111 = vector.broadcast %cst_27 : f32 to vector<8x16xf32>
    %112 = arith.subf %111, %105 : vector<8x16xf32>
    %113 = arith.mulf %112, %110 : vector<8x16xf32>
    %114 = arith.mulf %105, %90 : vector<8x16xf32>
    %115 = arith.addf %113, %114 : vector<8x16xf32>
    %116 = arith.addf %91, %115 : vector<8x16xf32>
    %117 = vector.extract_strided_slice %115 {offsets = [0, 8], sizes = [8, 8], strides = [1, 1]} : vector<8x16xf32> to vector<8x8xf32>
    %118 = tpu.concatenate %41, %117 in 1 : vector<8x8xf32>, vector<8x8xf32> -> vector<8x16xf32>
    %119 = arith.subf %116, %118 : vector<8x16xf32>
    %cst_28 = arith.constant 0.333333343 : f32
    %120 = vector.broadcast %cst_28 : f32 to vector<8x16xf32>
    %121 = arith.mulf %119, %120 : vector<8x16xf32>
    %122 = tpu.concatenate %118, %121 in 1 : vector<8x16xf32>, vector<8x16xf32> -> vector<8x32xf32>
    %c0_29 = arith.constant 0 : index
    %c0_30 = arith.constant 0 : index
    %123 = vector.load %arg8[%c0_29, %c0_30] : memref<32x16xf32, #tpu.memory_space<vmem>>, vector<32x16xf32>
    %cst_31 = arith.constant dense<0.000000e+00> : vector<8x16xf32>
    %124 = tpu.matmul %122, %123, %cst_31 {dimension_numbers = #tpu.dot_dimension_numbers<[1], [0], [0], [1], [0, 0, 1, 1], [], []>} : vector<8x32xf32>, vector<32x16xf32>, vector<8x16xf32> -> vector<8x16xf32>
    %c0_32 = arith.constant 0 : index
    %c0_33 = arith.constant 0 : index
    %125 = vector.load %arg7[%c0_32, %c0_33] : memref<2x8xf32, #tpu.memory_space<vmem>>, vector<2x8xf32>
    %cst_34 = arith.constant dense<0.000000e+00> : vector<2x16xf32>
    %126 = tpu.matmul %125, %124, %cst_34 {dimension_numbers = #tpu.dot_dimension_numbers<[1], [0], [0], [1], [0, 0, 1, 1], [], []>} : vector<2x8xf32>, vector<8x16xf32>, vector<2x16xf32> -> vector<2x16xf32>
    %c0_35 = arith.constant 0 : index
    %c0_36 = arith.constant 0 : index
    %127 = vector.load %arg9[%c0_35, %c0_36] : memref<1x16xf32, #tpu.memory_space<vmem>>, vector<1x16xf32>
    %128 = vector.broadcast %127 : vector<1x16xf32> to vector<2x16xf32>
    %129 = arith.addf %126, %128 : vector<2x16xf32>
    %130 = math.tanh %129 : vector<2x16xf32>
    %c0_37 = arith.constant 0 : index
    %c0_38 = arith.constant 0 : index
    %131 = vector.load %arg10[%c0_37, %c0_38] : memref<16x1xf32, #tpu.memory_space<vmem>>, vector<16x1xf32>
    %cst_39 = arith.constant dense<0.000000e+00> : vector<2x1xf32>
    %132 = tpu.matmul %130, %131, %cst_39 {dimension_numbers = #tpu.dot_dimension_numbers<[1], [0], [0], [1], [0, 0, 1, 1], [], []>} : vector<2x16xf32>, vector<16x1xf32>, vector<2x1xf32> -> vector<2x1xf32>
    %c0_40 = arith.constant 0 : index
    %c0_41 = arith.constant 0 : index
    %133 = vector.load %arg11[%c0_40, %c0_41] : memref<1x1xf32, #tpu.memory_space<vmem>>, vector<1x1xf32>
    %134 = vector.broadcast %133 : vector<1x1xf32> to vector<2x1xf32>
    %135 = arith.addf %132, %134 : vector<2x1xf32>
    %c0_42 = arith.constant 0 : index
    %c0_43 = arith.constant 0 : index
    %136 = vector.load %arg12[%c0_42, %c0_43] : memref<2x1xf32, #tpu.memory_space<vmem>>, vector<2x1xf32>
    tpu.vector_store %arg12[%c0_42, %c0_43], %135 {strides = array<i32>} : memref<2x1xf32, #tpu.memory_space<vmem>>, vector<2x1xf32>,
    return
  }
}

</mosaic_0001>

<llo_original>
// kernel: _little_forward.1
$region0: #{_little_forward.1}
  #allocation0 [shape = 'u32[]', space=smem, size = 0x4, offset = 0x4, fixed_abs, tag = 'smem constant byte address 0x4 - core index']
  #allocation1 [shape = 'u32[144,128]{1,0:T(1,128)}', space=vmem, size = 0x12000, scoped, tag = 'internal scratch']
  #allocation2 [shape = 'f32[1,1]{1,0:T(1,128)S(1)}', space=vmem, size = 0x200, scoped, tag = 'scoped memory for _little_forward.1']
  %s0 = inlined_call_operand.vmem [shape: f32[32,16], index: 0, kind: input, shape index: {}]
  %s1 = inlined_call_operand.vmem [shape: f32[16,16], index: 1, kind: input, shape index: {}]
  %s2 = inlined_call_operand.vmem [shape: f32[1,16], index: 2, kind: input, shape index: {}]
  %s3 = inlined_call_operand.vmem [shape: f32[16,48], index: 3, kind: input, shape index: {}]
  %s4 = inlined_call_operand.vmem [shape: f32[1,48], index: 4, kind: input, shape index: {}]
  %s5 = inlined_call_operand.vmem [shape: f32[16,48], index: 5, kind: input, shape index: {}]
  %s6 = inlined_call_operand.vmem [shape: f32[1,48], index: 6, kind: input, shape index: {}]
  %s7 = inlined_call_operand.vmem [shape: f32[2,8], index: 7, kind: input, shape index: {}]
  %s8 = inlined_call_operand.vmem [shape: f32[32,16], index: 8, kind: input, shape index: {}]
  %s9 = inlined_call_operand.vmem [shape: f32[1,16], index: 9, kind: input, shape index: {}]
  %s10 = inlined_call_operand.vmem [shape: f32[16,1], index: 10, kind: input, shape index: {}]
  %s11 = inlined_call_operand.<no memory space> [shape: f32[1,1], index: 11, kind: input, shape index: {}]
  %s12 = inlined_call_operand.vmem [shape: f32[2,1], index: 12, kind: output, shape index: {}]
  %s13 = sld [smem:[#allocation0]]
  $region58: #{_little_forward.1} parent=0
    _
  %s15 = ssub.s32 1, %s13
  %s16 = scalar_select 0, %s15, %s13
  %v17 = vstv %s11
  %18 = vst [vmem:[#allocation2] sm:$0x1] %v17
  // Predicated region
  $region2: #{_little_forward.1} parent=0 // pred_check
    _
  $region3: #{_little_forward.1} parent=0 // pred_check_branch
    %20 = sbr.rel (0) target = $region5
  $region4: #{_little_forward.1} parent=0 // pred_region
    _
  $region5: #{_little_forward.1} parent=0 // pred_fallthru
    _
  // Predicated region
  $region6: #{_little_forward.1} parent=0 // pred_check
    _
  $region7: #{_little_forward.1} parent=0 // pred_check_branch
    %22 = sbr.rel (0) target = $region9
  $region8: #{_little_forward.1} parent=0 // pred_region
    _
  $region9: #{_little_forward.1} parent=0 // pred_fallthru
    _
  // Predicated region
  $region10: #{_little_forward.1} parent=0 // pred_check
    _
  $region11: #{_little_forward.1} parent=0 // pred_check_branch
    %24 = sbr.rel (0) target = $region13
  $region12: #{_little_forward.1} parent=0 // pred_region
    _
  $region13: #{_little_forward.1} parent=0 // pred_fallthru
    _
  // Predicated region
  $region14: #{_little_forward.1} parent=0 // pred_check
    _
  $region15: #{_little_forward.1} parent=0 // pred_check_branch
    %26 = sbr.rel (0) target = $region17
  $region16: #{_little_forward.1} parent=0 // pred_region
    _
  $region17: #{_little_forward.1} parent=0 // pred_fallthru
    _
  // Predicated region
  $region18: #{_little_forward.1} parent=0 // pred_check
    _
  $region19: #{_little_forward.1} parent=0 // pred_check_branch
    %28 = sbr.rel (0) target = $region21
  $region20: #{_little_forward.1} parent=0 // pred_region
    _
  $region21: #{_little_forward.1} parent=0 // pred_fallthru
    _
  // Predicated region
  $region22: #{_little_forward.1} parent=0 // pred_check
    _
  $region23: #{_little_forward.1} parent=0 // pred_check_branch
    %30 = sbr.rel (0) target = $region25
  $region24: #{_little_forward.1} parent=0 // pred_region
    _
  $region25: #{_little_forward.1} parent=0 // pred_fallthru
    _
  // Predicated region
  $region26: #{_little_forward.1} parent=0 // pred_check
    _
  $region27: #{_little_forward.1} parent=0 // pred_check_branch
    %32 = sbr.rel (0) target = $region29
  $region28: #{_little_forward.1} parent=0 // pred_region
    _
  $region29: #{_little_forward.1} parent=0 // pred_fallthru
    _
  // Predicated region
  $region30: #{_little_forward.1} parent=0 // pred_check
    _
  $region31: #{_little_forward.1} parent=0 // pred_check_branch
    %34 = sbr.rel (0) target = $region33
  $region32: #{_little_forward.1} parent=0 // pred_region
    _
  $region33: #{_little_forward.1} parent=0 // pred_fallthru
    _
  // Predicated region
  $region34: #{_little_forward.1} parent=0 // pred_check
    _
  $region35: #{_little_forward.1} parent=0 // pred_check_branch
    %36 = sbr.rel (0) target = $region37
  $region36: #{_little_forward.1} parent=0 // pred_region
    _
  $region37: #{_little_forward.1} parent=0 // pred_fallthru
    _
  // Predicated region
  $region38: #{_little_forward.1} parent=0 // pred_check
    _
  $region39: #{_little_forward.1} parent=0 // pred_check_branch
    %38 = sbr.rel (0) target = $region41
  $region40: #{_little_forward.1} parent=0 // pred_region
    _
  $region41: #{_little_forward.1} parent=0 // pred_fallthru
    _
  // Predicated region
  $region42: #{_little_forward.1} parent=0 // pred_check
    _
  $region43: #{_little_forward.1} parent=0 // pred_check_branch
    %40 = sbr.rel (0) target = $region45
  $region44: #{_little_forward.1} parent=0 // pred_region
    _
  $region45: #{_little_forward.1} parent=0 // pred_fallthru
    _
  // Predicated region
  $region46: #{_little_forward.1} parent=0 // pred_check
    _
  $region47: #{_little_forward.1} parent=0 // pred_check_branch
    %42 = sbr.rel (0) target = $region49
  $region48: #{_little_forward.1} parent=0 // pred_region
    _
  $region49: #{_little_forward.1} parent=0 // pred_fallthru
    _
  %v43 = vld [vmem:[%s0] sm:$0xff]
  %v44 = vld [vmem:[%s0 + $0x8] sm:$0xff]
  %v45 = vld [vmem:[%s0 + $0x10] sm:$0xff]
  %v46 = vld [vmem:[%s0 + $0x18] sm:$0xff]
  %v47 = vld [vmem:[%s1] sm:$0xff]
  %v48 = vld [vmem:[%s1 + $0x8] sm:$0xff]
  %v49 = vld [vmem:[%s2] sm:$0x1]
  %v51 = vlaneseq
  %v52 = vshrl.u32 %v51, 7
  %v53 = vsub.s32 0, %v52
  %v54 = vrot.slane %v49, %v53
  %vm56 = vcmask 130048
  %v58 = vsel %vm56, %v43, 0
  %v61 = vsel %vm56, %v44, 0
  %v64 = vsel %vm56, %v45, 0
  %v67 = vsel %vm56, %v46, 0
  %69 = vmatprep.subr.mxu0 0.0
  %70 = vmatpush1.msra.mxu0 0.0
  %71 = vmatprep.subr.mxu0 0.0
  %72 = vmatpush1.msra.mxu0 0.0
  %73 = vmatprep.subr.mxu0 0.0
  %74 = vmatpush1.msra.mxu0 0.0
  %75 = vmatprep.subr.mxu0 0.0
  %76 = vmatpush1.msra.mxu0 0.0
  %77 = vmatprep.subr.mxu0 0.0
  %78 = vmatpush1.msra.mxu0 0.0
  %79 = vmatprep.subr.mxu0 0.0
  %80 = vmatpush1.msra.mxu0 0.0
  %81 = vmatprep.subr.mxu0 0.0
  %82 = vmatpush1.msra.mxu0 0.0
  %83 = vmatprep.subr.mxu0 0.0
  %84 = vmatpush1.msra.mxu0 0.0
  %85 = vmatprep.subr.mxu0 0.0
  %86 = vmatpush1.msra.mxu0 0.0
  %87 = vmatprep.subr.mxu0 0.0
  %88 = vmatpush1.msra.mxu0 0.0
  %89 = vmatprep.subr.mxu0 0.0
  %90 = vmatpush1.msra.mxu0 0.0
  %91 = vmatprep.subr.mxu0 0.0
  %92 = vmatpush1.msra.mxu0 0.0
  %93 = vmatprep.subr.mxu0 0.0
  %94 = vmatpush1.msra.mxu0 0.0
  %95 = vmatprep.subr.mxu0 0.0
  %96 = vmatpush1.msra.mxu0 0.0
  %97 = vmatprep.subr.mxu0 0.0
  %98 = vmatpush1.msra.mxu0 %v48
  %99 = vmatprep.subr.mxu0 0.0
  %100 = vmatpush1.msra.mxu0 %v47
  %101 = vmatprep.subr.mxu0 0.0
  %102 = vmatpush2.msra.mxu0 0.0
  %103 = vmatprep.subr.mxu0 0.0
  %104 = vmatpush2.msra.mxu0 0.0
  %105 = vmatprep.subr.mxu0 0.0
  %106 = vmatpush2.msra.mxu0 0.0
  %107 = vmatprep.subr.mxu0 0.0
  %108 = vmatpush2.msra.mxu0 0.0
  %109 = vmatprep.subr.mxu0 0.0
  %110 = vmatpush2.msra.mxu0 0.0
  %111 = vmatprep.subr.mxu0 0.0
  %112 = vmatpush2.msra.mxu0 0.0
  %113 = vmatprep.subr.mxu0 0.0
  %114 = vmatpush2.msra.mxu0 0.0
  %115 = vmatprep.subr.mxu0 0.0
  %116 = vmatpush2.msra.mxu0 0.0
  %117 = vmatprep.subr.mxu0 0.0
  %118 = vmatpush2.msra.mxu0 0.0
  %119 = vmatprep.subr.mxu0 0.0
  %120 = vmatpush2.msra.mxu0 0.0
  %121 = vmatprep.subr.mxu0 0.0
  %122 = vmatpush2.msra.mxu0 0.0
  %123 = vmatprep.subr.mxu0 0.0
  %124 = vmatpush2.msra.mxu0 0.0
  %125 = vmatprep.subr.mxu0 0.0
  %126 = vmatpush2.msra.mxu0 0.0
  %127 = vmatprep.subr.mxu0 0.0
  %128 = vmatpush2.msra.mxu0 0.0
  %129 = vmatprep.subr.mxu0 0.0
  %130 = vmatpush2.msra.mxu0 0.0
  %131 = vmatprep.subr.mxu0 0.0
  %132 = vmatpush2.msra.mxu0 0.0
  %133 = vmatprep.mubr.f32.mxu0 0.0
  %134 = vmatmul.mubr.f32.gmra.mxu0 %v58
  %v135 = vpop.f32.mrf.mxu0
  %v136 = vadd.f32 %v54, %v135
  %v137 = vpop.f32.mrf.mxu0
  %138 = vmatprep.mubr.f32.mxu0 0.0
  %139 = vmatmul.mubr.f32.gmra.mxu0 %v61
  %v140 = vpop.f32.mrf.mxu0
  %v141 = vadd.f32 %v54, %v140
  %v142 = vpop.f32.mrf.mxu0
  %143 = vmatprep.mubr.f32.mxu0 0.0
  %144 = vmatmul.mubr.f32.gmra.mxu0 %v64
  %v145 = vpop.f32.mrf.mxu0
  %v146 = vadd.f32 %v54, %v145
  %v147 = vpop.f32.mrf.mxu0
  %148 = vmatprep.mubr.f32.mxu0 0.0
  %149 = vmatmul.mubr.f32.gmra.mxu0 %v67
  %v150 = vpop.f32.mrf.mxu0
  %v151 = vadd.f32 %v54, %v150
  %v152 = vpop.f32.mrf.mxu0
  %153 = vdwg.mxu0
  %v154 = vtanh.pop %v136
  %v155 = vtanh.pop %v141
  %v156 = vtanh.pop %v146
  %v157 = vtanh.pop %v151
  %v158 = vld [vmem:[%s3] sm:$0xff]
  %v159 = vld [vmem:[%s3 + $0x8] sm:$0xff]
  %v160 = vld [vmem:[%s4] sm:$0x1]
  %v162 = vlaneseq
  %v163 = vshrl.u32 %v162, 7
  %v164 = vsub.s32 0, %v163
  %v165 = vrot.slane %v160, %v164
  %v168 = vsel %vm56, %v154, 0
  %v171 = vsel %vm56, %v155, 0
  %v174 = vsel %vm56, %v156, 0
  %v177 = vsel %vm56, %v157, 0
  %179 = vmatprep.subr.mxu0 0.0
  %180 = vmatpush1.msra.mxu0 0.0
  %181 = vmatprep.subr.mxu0 0.0
  %182 = vmatpush1.msra.mxu0 0.0
  %183 = vmatprep.subr.mxu0 0.0
  %184 = vmatpush1.msra.mxu0 0.0
  %185 = vmatprep.subr.mxu0 0.0
  %186 = vmatpush1.msra.mxu0 0.0
  %187 = vmatprep.subr.mxu0 0.0
  %188 = vmatpush1.msra.mxu0 0.0
  %189 = vmatprep.subr.mxu0 0.0
  %190 = vmatpush1.msra.mxu0 0.0
  %191 = vmatprep.subr.mxu0 0.0
  %192 = vmatpush1.msra.mxu0 0.0
  %193 = vmatprep.subr.mxu0 0.0
  %194 = vmatpush1.msra.mxu0 0.0
  %195 = vmatprep.subr.mxu0 0.0
  %196 = vmatpush1.msra.mxu0 0.0
  %197 = vmatprep.subr.mxu0 0.0
  %198 = vmatpush1.msra.mxu0 0.0
  %199 = vmatprep.subr.mxu0 0.0
  %200 = vmatpush1.msra.mxu0 0.0
  %201 = vmatprep.subr.mxu0 0.0
  %202 = vmatpush1.msra.mxu0 0.0
  %203 = vmatprep.subr.mxu0 0.0
  %204 = vmatpush1.msra.mxu0 0.0
  %205 = vmatprep.subr.mxu0 0.0
  %206 = vmatpush1.msra.mxu0 0.0
  %207 = vmatprep.subr.mxu0 0.0
  %208 = vmatpush1.msra.mxu0 %v159
  %209 = vmatprep.subr.mxu0 0.0
  %210 = vmatpush1.msra.mxu0 %v158
  %211 = vmatprep.subr.mxu0 0.0
  %212 = vmatpush2.msra.mxu0 0.0
  %213 = vmatprep.subr.mxu0 0.0
  %214 = vmatpush2.msra.mxu0 0.0
  %215 = vmatprep.subr.mxu0 0.0
  %216 = vmatpush2.msra.mxu0 0.0
  %217 = vmatprep.subr.mxu0 0.0
  %218 = vmatpush2.msra.mxu0 0.0
  %219 = vmatprep.subr.mxu0 0.0
  %220 = vmatpush2.msra.mxu0 0.0
  %221 = vmatprep.subr.mxu0 0.0
  %222 = vmatpush2.msra.mxu0 0.0
  %223 = vmatprep.subr.mxu0 0.0
  %224 = vmatpush2.msra.mxu0 0.0
  %225 = vmatprep.subr.mxu0 0.0
  %226 = vmatpush2.msra.mxu0 0.0
  %227 = vmatprep.subr.mxu0 0.0
  %228 = vmatpush2.msra.mxu0 0.0
  %229 = vmatprep.subr.mxu0 0.0
  %230 = vmatpush2.msra.mxu0 0.0
  %231 = vmatprep.subr.mxu0 0.0
  %232 = vmatpush2.msra.mxu0 0.0
  %233 = vmatprep.subr.mxu0 0.0
  %234 = vmatpush2.msra.mxu0 0.0
  %235 = vmatprep.subr.mxu0 0.0
  %236 = vmatpush2.msra.mxu0 0.0
  %237 = vmatprep.subr.mxu0 0.0
  %238 = vmatpush2.msra.mxu0 0.0
  %239 = vmatprep.subr.mxu0 0.0
  %240 = vmatpush2.msra.mxu0 0.0
  %241 = vmatprep.subr.mxu0 0.0
  %242 = vmatpush2.msra.mxu0 0.0
  %243 = vmatprep.mubr.f32.mxu0 0.0
  %244 = vmatmul.mubr.f32.gmra.mxu0 %v168
  %v245 = vpop.f32.mrf.mxu0
  %v246 = vadd.f32 %v165, %v245
  %v247 = vpop.f32.mrf.mxu0
  %248 = vmatprep.mubr.f32.mxu0 0.0
  %249 = vmatmul.mubr.f32.gmra.mxu0 %v171
  %v250 = vpop.f32.mrf.mxu0
  %v251 = vadd.f32 %v165, %v250
  %v252 = vpop.f32.mrf.mxu0
  %253 = vmatprep.mubr.f32.mxu0 0.0
  %254 = vmatmul.mubr.f32.gmra.mxu0 %v174
  %v255 = vpop.f32.mrf.mxu0
  %v256 = vadd.f32 %v165, %v255
  %v257 = vpop.f32.mrf.mxu0
  %258 = vmatprep.mubr.f32.mxu0 0.0
  %259 = vmatmul.mubr.f32.gmra.mxu0 %v177
  %v260 = vpop.f32.mrf.mxu0
  %v261 = vadd.f32 %v165, %v260
  %v262 = vpop.f32.mrf.mxu0
  %263 = vdwg.mxu0
  %v264 = vld [vmem:[%s5] sm:$0xff]
  %v265 = vld [vmem:[%s5 + $0x8] sm:$0xff]
  %v266 = vld [vmem:[%s6] sm:$0x1]
  %v268 = vlaneseq
  %v269 = vshrl.u32 %v268, 7
  %v270 = vsub.s32 0, %v269
  %v271 = vrot.slane %v266, %v270
  %v274 = vsel %vm56, 0.0, 0
  %276 = vmatprep.subr.mxu0 0.0
  %277 = vmatpush1.msra.mxu0 0.0
  %278 = vmatprep.subr.mxu0 0.0
  %279 = vmatpush1.msra.mxu0 0.0
  %280 = vmatprep.subr.mxu0 0.0
  %281 = vmatpush1.msra.mxu0 0.0
  %282 = vmatprep.subr.mxu0 0.0
  %283 = vmatpush1.msra.mxu0 0.0
  %284 = vmatprep.subr.mxu0 0.0
  %285 = vmatpush1.msra.mxu0 0.0
  %286 = vmatprep.subr.mxu0 0.0
  %287 = vmatpush1.msra.mxu0 0.0
  %288 = vmatprep.subr.mxu0 0.0
  %289 = vmatpush1.msra.mxu0 0.0
  %290 = vmatprep.subr.mxu0 0.0
  %291 = vmatpush1.msra.mxu0 0.0
  %292 = vmatprep.subr.mxu0 0.0
  %293 = vmatpush1.msra.mxu0 0.0
  %294 = vmatprep.subr.mxu0 0.0
  %295 = vmatpush1.msra.mxu0 0.0
  %296 = vmatprep.subr.mxu0 0.0
  %297 = vmatpush1.msra.mxu0 0.0
  %298 = vmatprep.subr.mxu0 0.0
  %299 = vmatpush1.msra.mxu0 0.0
  %300 = vmatprep.subr.mxu0 0.0
  %301 = vmatpush1.msra.mxu0 0.0
  %302 = vmatprep.subr.mxu0 0.0
  %303 = vmatpush1.msra.mxu0 0.0
  %304 = vmatprep.subr.mxu0 0.0
  %305 = vmatpush1.msra.mxu0 %v265
  %306 = vmatprep.subr.mxu0 0.0
  %307 = vmatpush1.msra.mxu0 %v264
  %308 = vmatprep.subr.mxu0 0.0
  %309 = vmatpush2.msra.mxu0 0.0
  %310 = vmatprep.subr.mxu0 0.0
  %311 = vmatpush2.msra.mxu0 0.0
  %312 = vmatprep.subr.mxu0 0.0
  %313 = vmatpush2.msra.mxu0 0.0
  %314 = vmatprep.subr.mxu0 0.0
  %315 = vmatpush2.msra.mxu0 0.0
  %316 = vmatprep.subr.mxu0 0.0
  %317 = vmatpush2.msra.mxu0 0.0
  %318 = vmatprep.subr.mxu0 0.0
  %319 = vmatpush2.msra.mxu0 0.0
  %320 = vmatprep.subr.mxu0 0.0
  %321 = vmatpush2.msra.mxu0 0.0
  %322 = vmatprep.subr.mxu0 0.0
  %323 = vmatpush2.msra.mxu0 0.0
  %324 = vmatprep.subr.mxu0 0.0
  %325 = vmatpush2.msra.mxu0 0.0
  %326 = vmatprep.subr.mxu0 0.0
  %327 = vmatpush2.msra.mxu0 0.0
  %328 = vmatprep.subr.mxu0 0.0
  %329 = vmatpush2.msra.mxu0 0.0
  %330 = vmatprep.subr.mxu0 0.0
  %331 = vmatpush2.msra.mxu0 0.0
  %332 = vmatprep.subr.mxu0 0.0
  %333 = vmatpush2.msra.mxu0 0.0
  %334 = vmatprep.subr.mxu0 0.0
  %335 = vmatpush2.msra.mxu0 0.0
  %336 = vmatprep.subr.mxu0 0.0
  %337 = vmatpush2.msra.mxu0 0.0
  %338 = vmatprep.subr.mxu0 0.0
  %339 = vmatpush2.msra.mxu0 0.0
  %340 = vmatprep.mubr.f32.mxu0 0.0
  %341 = vmatmul.mubr.f32.gmra.mxu0 %v274
  %v342 = vpop.f32.mrf.mxu0
  %v343 = vadd.f32 %v271, %v342
  %v344 = vpop.f32.mrf.mxu0
  %345 = vdwg.mxu0
  %v346 = vadd.f32 %v246, %v343
  %v347 = vxor.u32 %v346, 2147483648
  %v348 = vmul.f32 %v347, 1.442695
  %v349 = vpow.pop %v348
  %v350 = vadd.f32 %v349, 1.0
  %v351 = vrcp.pop %v350
  %v352 = vmul.f32 1.0, %v351
  %354 = vrot.lane.b32.xlu0 %v343, 96
  %v355 = vpop.permute.xlu0 %354
  %v357 = vmul.f32 %v352, %v355
  %359 = vrot.lane.b32.xlu0 %v357, 32
  %v360 = vpop.permute.xlu0 %359
  %v362 = vadd.f32 %v246, %v360
  %v363 = vtanh.pop %v362
  %v364 = vsub.f32 1.0, %v352
  %366 = vrot.lane.b32.xlu0 %v363, 112
  %v367 = vpop.permute.xlu0 %366
  %v369 = vmul.f32 %v364, %v367
  %v370 = vmul.f32 %v352, 0.0
  %v371 = vadd.f32 %v369, %v370
  %v372 = vadd.f32 %v371, 0.0
  %374 = vrot.lane.b32.xlu0 %v371, 112
  %v375 = vpop.permute.xlu0 %374
  %v376 = vsel %vm56, %v375, 0
  %378 = vmatprep.subr.mxu0 0.0
  %379 = vmatpush1.msra.mxu0 0.0
  %380 = vmatprep.subr.mxu0 0.0
  %381 = vmatpush1.msra.mxu0 0.0
  %382 = vmatprep.subr.mxu0 0.0
  %383 = vmatpush1.msra.mxu0 0.0
  %384 = vmatprep.subr.mxu0 0.0
  %385 = vmatpush1.msra.mxu0 0.0
  %386 = vmatprep.subr.mxu0 0.0
  %387 = vmatpush1.msra.mxu0 0.0
  %388 = vmatprep.subr.mxu0 0.0
  %389 = vmatpush1.msra.mxu0 0.0
  %390 = vmatprep.subr.mxu0 0.0
  %391 = vmatpush1.msra.mxu0 0.0
  %392 = vmatprep.subr.mxu0 0.0
  %393 = vmatpush1.msra.mxu0 0.0
  %394 = vmatprep.subr.mxu0 0.0
  %395 = vmatpush1.msra.mxu0 0.0
  %396 = vmatprep.subr.mxu0 0.0
  %397 = vmatpush1.msra.mxu0 0.0
  %398 = vmatprep.subr.mxu0 0.0
  %399 = vmatpush1.msra.mxu0 0.0
  %400 = vmatprep.subr.mxu0 0.0
  %401 = vmatpush1.msra.mxu0 0.0
  %402 = vmatprep.subr.mxu0 0.0
  %403 = vmatpush1.msra.mxu0 0.0
  %404 = vmatprep.subr.mxu0 0.0
  %405 = vmatpush1.msra.mxu0 0.0
  %406 = vmatprep.subr.mxu0 0.0
  %407 = vmatpush1.msra.mxu0 %v265
  %408 = vmatprep.subr.mxu0 0.0
  %409 = vmatpush1.msra.mxu0 %v264
  %410 = vmatprep.subr.mxu0 0.0
  %411 = vmatpush2.msra.mxu0 0.0
  %412 = vmatprep.subr.mxu0 0.0
  %413 = vmatpush2.msra.mxu0 0.0
  %414 = vmatprep.subr.mxu0 0.0
  %415 = vmatpush2.msra.mxu0 0.0
  %416 = vmatprep.subr.mxu0 0.0
  %417 = vmatpush2.msra.mxu0 0.0
  %418 = vmatprep.subr.mxu0 0.0
  %419 = vmatpush2.msra.mxu0 0.0
  %420 = vmatprep.subr.mxu0 0.0
  %421 = vmatpush2.msra.mxu0 0.0
  %422 = vmatprep.subr.mxu0 0.0
  %423 = vmatpush2.msra.mxu0 0.0
  %424 = vmatprep.subr.mxu0 0.0
  %425 = vmatpush2.msra.mxu0 0.0
  %426 = vmatprep.subr.mxu0 0.0
  %427 = vmatpush2.msra.mxu0 0.0
  %428 = vmatprep.subr.mxu0 0.0
  %429 = vmatpush2.msra.mxu0 0.0
  %430 = vmatprep.subr.mxu0 0.0
  %431 = vmatpush2.msra.mxu0 0.0
  %432 = vmatprep.subr.mxu0 0.0
  %433 = vmatpush2.msra.mxu0 0.0
  %434 = vmatprep.subr.mxu0 0.0
  %435 = vmatpush2.msra.mxu0 0.0
  %436 = vmatprep.subr.mxu0 0.0
  %437 = vmatpush2.msra.mxu0 0.0
  %438 = vmatprep.subr.mxu0 0.0
  %439 = vmatpush2.msra.mxu0 0.0
  %440 = vmatprep.subr.mxu0 0.0
  %441 = vmatpush2.msra.mxu0 0.0
  %442 = vmatprep.mubr.f32.mxu0 0.0
  %443 = vmatmul.mubr.f32.gmra.mxu0 %v376
  %v444 = vpop.f32.mrf.mxu0
  %v445 = vadd.f32 %v271, %v444
  %v446 = vpop.f32.mrf.mxu0
  %447 = vdwg.mxu0
  %v448 = vadd.f32 %v251, %v445
  %v449 = vxor.u32 %v448, 2147483648
  %v450 = vmul.f32 %v449, 1.442695
  %v451 = vpow.pop %v450
  %v452 = vadd.f32 %v451, 1.0
  %v453 = vrcp.pop %v452
  %v454 = vmul.f32 1.0, %v453
  %456 = vrot.lane.b32.xlu0 %v445, 96
  %v457 = vpop.permute.xlu0 %456
  %v459 = vmul.f32 %v454, %v457
  %461 = vrot.lane.b32.xlu0 %v459, 32
  %v462 = vpop.permute.xlu0 %461
  %v464 = vadd.f32 %v251, %v462
  %v465 = vtanh.pop %v464
  %v466 = vsub.f32 1.0, %v454
  %468 = vrot.lane.b32.xlu0 %v465, 112
  %v469 = vpop.permute.xlu0 %468
  %v471 = vmul.f32 %v466, %v469
  %v472 = vmul.f32 %v454, %v371
  %v473 = vadd.f32 %v471, %v472
  %v474 = vadd.f32 %v372, %v473
  %476 = vrot.lane.b32.xlu0 %v473, 112
  %v477 = vpop.permute.xlu0 %476
  %v478 = vsel %vm56, %v477, 0
  %480 = vmatprep.subr.mxu0 0.0
  %481 = vmatpush1.msra.mxu0 0.0
  %482 = vmatprep.subr.mxu0 0.0
  %483 = vmatpush1.msra.mxu0 0.0
  %484 = vmatprep.subr.mxu0 0.0
  %485 = vmatpush1.msra.mxu0 0.0
  %486 = vmatprep.subr.mxu0 0.0
  %487 = vmatpush1.msra.mxu0 0.0
  %488 = vmatprep.subr.mxu0 0.0
  %489 = vmatpush1.msra.mxu0 0.0
  %490 = vmatprep.subr.mxu0 0.0
  %491 = vmatpush1.msra.mxu0 0.0
  %492 = vmatprep.subr.mxu0 0.0
  %493 = vmatpush1.msra.mxu0 0.0
  %494 = vmatprep.subr.mxu0 0.0
  %495 = vmatpush1.msra.mxu0 0.0
  %496 = vmatprep.subr.mxu0 0.0
  %497 = vmatpush1.msra.mxu0 0.0
  %498 = vmatprep.subr.mxu0 0.0
  %499 = vmatpush1.msra.mxu0 0.0
  %500 = vmatprep.subr.mxu0 0.0
  %501 = vmatpush1.msra.mxu0 0.0
  %502 = vmatprep.subr.mxu0 0.0
  %503 = vmatpush1.msra.mxu0 0.0
  %504 = vmatprep.subr.mxu0 0.0
  %505 = vmatpush1.msra.mxu0 0.0
  %506 = vmatprep.subr.mxu0 0.0
  %507 = vmatpush1.msra.mxu0 0.0
  %508 = vmatprep.subr.mxu0 0.0
  %509 = vmatpush1.msra.mxu0 %v265
  %510 = vmatprep.subr.mxu0 0.0
  %511 = vmatpush1.msra.mxu0 %v264
  %512 = vmatprep.subr.mxu0 0.0
  %513 = vmatpush2.msra.mxu0 0.0
  %514 = vmatprep.subr.mxu0 0.0
  %515 = vmatpush2.msra.mxu0 0.0
  %516 = vmatprep.subr.mxu0 0.0
  %517 = vmatpush2.msra.mxu0 0.0
  %518 = vmatprep.subr.mxu0 0.0
  %519 = vmatpush2.msra.mxu0 0.0
  %520 = vmatprep.subr.mxu0 0.0
  %521 = vmatpush2.msra.mxu0 0.0
  %522 = vmatprep.subr.mxu0 0.0
  %523 = vmatpush2.msra.mxu0 0.0
  %524 = vmatprep.subr.mxu0 0.0
  %525 = vmatpush2.msra.mxu0 0.0
  %526 = vmatprep.subr.mxu0 0.0
  %527 = vmatpush2.msra.mxu0 0.0
  %528 = vmatprep.subr.mxu0 0.0
  %529 = vmatpush2.msra.mxu0 0.0
  %530 = vmatprep.subr.mxu0 0.0
  %531 = vmatpush2.msra.mxu0 0.0
  %532 = vmatprep.subr.mxu0 0.0
  %533 = vmatpush2.msra.mxu0 0.0
  %534 = vmatprep.subr.mxu0 0.0
  %535 = vmatpush2.msra.mxu0 0.0
  %536 = vmatprep.subr.mxu0 0.0
  %537 = vmatpush2.msra.mxu0 0.0
  %538 = vmatprep.subr.mxu0 0.0
  %539 = vmatpush2.msra.mxu0 0.0
  %540 = vmatprep.subr.mxu0 0.0
  %541 = vmatpush2.msra.mxu0 0.0
  %542 = vmatprep.subr.mxu0 0.0
  %543 = vmatpush2.msra.mxu0 0.0
  %544 = vmatprep.mubr.f32.mxu0 0.0
  %545 = vmatmul.mubr.f32.gmra.mxu0 %v478
  %v546 = vpop.f32.mrf.mxu0
  %v547 = vadd.f32 %v271, %v546
  %v548 = vpop.f32.mrf.mxu0
  %549 = vdwg.mxu0
  %v550 = vadd.f32 %v256, %v547
  %v551 = vxor.u32 %v550, 2147483648
  %v552 = vmul.f32 %v551, 1.442695
  %v553 = vpow.pop %v552
  %v554 = vadd.f32 %v553, 1.0
  %v555 = vrcp.pop %v554
  %v556 = vmul.f32 1.0, %v555
  %558 = vrot.lane.b32.xlu0 %v547, 96
  %v559 = vpop.permute.xlu0 %558
  %v561 = vmul.f32 %v556, %v559
  %563 = vrot.lane.b32.xlu0 %v561, 32
  %v564 = vpop.permute.xlu0 %563
  %v566 = vadd.f32 %v256, %v564
  %v567 = vtanh.pop %v566
  %v568 = vsub.f32 1.0, %v556
  %570 = vrot.lane.b32.xlu0 %v567, 112
  %v571 = vpop.permute.xlu0 %570
  %v573 = vmul.f32 %v568, %v571
  %v574 = vmul.f32 %v556, %v473
  %v575 = vadd.f32 %v573, %v574
  %v576 = vadd.f32 %v474, %v575
  %578 = vrot.lane.b32.xlu0 %v575, 112
  %v579 = vpop.permute.xlu0 %578
  %v580 = vsel %vm56, %v579, 0
  %582 = vmatprep.subr.mxu0 0.0
  %583 = vmatpush1.msra.mxu0 0.0
  %584 = vmatprep.subr.mxu0 0.0
  %585 = vmatpush1.msra.mxu0 0.0
  %586 = vmatprep.subr.mxu0 0.0
  %587 = vmatpush1.msra.mxu0 0.0
  %588 = vmatprep.subr.mxu0 0.0
  %589 = vmatpush1.msra.mxu0 0.0
  %590 = vmatprep.subr.mxu0 0.0
  %591 = vmatpush1.msra.mxu0 0.0
  %592 = vmatprep.subr.mxu0 0.0
  %593 = vmatpush1.msra.mxu0 0.0
  %594 = vmatprep.subr.mxu0 0.0
  %595 = vmatpush1.msra.mxu0 0.0
  %596 = vmatprep.subr.mxu0 0.0
  %597 = vmatpush1.msra.mxu0 0.0
  %598 = vmatprep.subr.mxu0 0.0
  %599 = vmatpush1.msra.mxu0 0.0
  %600 = vmatprep.subr.mxu0 0.0
  %601 = vmatpush1.msra.mxu0 0.0
  %602 = vmatprep.subr.mxu0 0.0
  %603 = vmatpush1.msra.mxu0 0.0
  %604 = vmatprep.subr.mxu0 0.0
  %605 = vmatpush1.msra.mxu0 0.0
  %606 = vmatprep.subr.mxu0 0.0
  %607 = vmatpush1.msra.mxu0 0.0
  %608 = vmatprep.subr.mxu0 0.0
  %609 = vmatpush1.msra.mxu0 0.0
  %610 = vmatprep.subr.mxu0 0.0
  %611 = vmatpush1.msra.mxu0 %v265
  %612 = vmatprep.subr.mxu0 0.0
  %613 = vmatpush1.msra.mxu0 %v264
  %614 = vmatprep.subr.mxu0 0.0
  %615 = vmatpush2.msra.mxu0 0.0
  %616 = vmatprep.subr.mxu0 0.0
  %617 = vmatpush2.msra.mxu0 0.0
  %618 = vmatprep.subr.mxu0 0.0
  %619 = vmatpush2.msra.mxu0 0.0
  %620 = vmatprep.subr.mxu0 0.0
  %621 = vmatpush2.msra.mxu0 0.0
  %622 = vmatprep.subr.mxu0 0.0
  %623 = vmatpush2.msra.mxu0 0.0
  %624 = vmatprep.subr.mxu0 0.0
  %625 = vmatpush2.msra.mxu0 0.0
  %626 = vmatprep.subr.mxu0 0.0
  %627 = vmatpush2.msra.mxu0 0.0
  %628 = vmatprep.subr.mxu0 0.0
  %629 = vmatpush2.msra.mxu0 0.0
  %630 = vmatprep.subr.mxu0 0.0
  %631 = vmatpush2.msra.mxu0 0.0
  %632 = vmatprep.subr.mxu0 0.0
  %633 = vmatpush2.msra.mxu0 0.0
  %634 = vmatprep.subr.mxu0 0.0
  %635 = vmatpush2.msra.mxu0 0.0
  %636 = vmatprep.subr.mxu0 0.0
  %637 = vmatpush2.msra.mxu0 0.0
  %638 = vmatprep.subr.mxu0 0.0
  %639 = vmatpush2.msra.mxu0 0.0
  %640 = vmatprep.subr.mxu0 0.0
  %641 = vmatpush2.msra.mxu0 0.0
  %642 = vmatprep.subr.mxu0 0.0
  %643 = vmatpush2.msra.mxu0 0.0
  %644 = vmatprep.subr.mxu0 0.0
  %645 = vmatpush2.msra.mxu0 0.0
  %646 = vmatprep.mubr.f32.mxu0 0.0
  %647 = vmatmul.mubr.f32.gmra.mxu0 %v580
  %v648 = vpop.f32.mrf.mxu0
  %v649 = vadd.f32 %v271, %v648
  %v650 = vpop.f32.mrf.mxu0
  %651 = vdwg.mxu0
  %v652 = vadd.f32 %v261, %v649
  %v653 = vxor.u32 %v652, 2147483648
  %v654 = vmul.f32 %v653, 1.442695
  %v655 = vpow.pop %v654
  %v656 = vadd.f32 %v655, 1.0
  %v657 = vrcp.pop %v656
  %v658 = vmul.f32 1.0, %v657
  %660 = vrot.lane.b32.xlu0 %v649, 96
  %v661 = vpop.permute.xlu0 %660
  %v663 = vmul.f32 %v658, %v661
  %665 = vrot.lane.b32.xlu0 %v663, 32
  %v666 = vpop.permute.xlu0 %665
  %v668 = vadd.f32 %v261, %v666
  %v669 = vtanh.pop %v668
  %v670 = vsub.f32 1.0, %v658
  %672 = vrot.lane.b32.xlu0 %v669, 112
  %v673 = vpop.permute.xlu0 %672
  %v675 = vmul.f32 %v670, %v673
  %v676 = vmul.f32 %v658, %v575
  %v677 = vadd.f32 %v675, %v676
  %v678 = vadd.f32 %v576, %v677
  %681 = vrot.lane.b32.xlu0 %v677, 112
  %v682 = vpop.permute.xlu0 %681
  %vm684 = vcmask 64512
  %v685 = vsel %vm684, %v375, %v682
  %687 = vrot.lane.b32.xlu0 %v685, 16
  %v688 = vpop.permute.xlu0 %687
  %v690 = vsub.f32 %v678, %v688
  %v691 = vmul.f32 %v690, 0.33333334
  %v692 = vsel %vm56, %v685, %v691
  %v693 = vld [vmem:[%s8] sm:$0xff]
  %v694 = vld [vmem:[%s8 + $0x8] sm:$0xff]
  %v695 = vld [vmem:[%s8 + $0x10] sm:$0xff]
  %v696 = vld [vmem:[%s8 + $0x18] sm:$0xff]
  %vm697 = vcmask 261120
  %v699 = vsel %vm697, %v692, 0
  %701 = vmatprep.subr.mxu0 0.0
  %702 = vmatpush1.msra.mxu0 0.0
  %703 = vmatprep.subr.mxu0 0.0
  %704 = vmatpush1.msra.mxu0 0.0
  %705 = vmatprep.subr.mxu0 0.0
  %706 = vmatpush1.msra.mxu0 0.0
  %707 = vmatprep.subr.mxu0 0.0
  %708 = vmatpush1.msra.mxu0 0.0
  %709 = vmatprep.subr.mxu0 0.0
  %710 = vmatpush1.msra.mxu0 0.0
  %711 = vmatprep.subr.mxu0 0.0
  %712 = vmatpush1.msra.mxu0 0.0
  %713 = vmatprep.subr.mxu0 0.0
  %714 = vmatpush1.msra.mxu0 0.0
  %715 = vmatprep.subr.mxu0 0.0
  %716 = vmatpush1.msra.mxu0 0.0
  %717 = vmatprep.subr.mxu0 0.0
  %718 = vmatpush1.msra.mxu0 0.0
  %719 = vmatprep.subr.mxu0 0.0
  %720 = vmatpush1.msra.mxu0 0.0
  %721 = vmatprep.subr.mxu0 0.0
  %722 = vmatpush1.msra.mxu0 0.0
  %723 = vmatprep.subr.mxu0 0.0
  %724 = vmatpush1.msra.mxu0 0.0
  %725 = vmatprep.subr.mxu0 0.0
  %726 = vmatpush1.msra.mxu0 %v696
  %727 = vmatprep.subr.mxu0 0.0
  %728 = vmatpush1.msra.mxu0 %v695
  %729 = vmatprep.subr.mxu0 0.0
  %730 = vmatpush1.msra.mxu0 %v694
  %731 = vmatprep.subr.mxu0 0.0
  %732 = vmatpush1.msra.mxu0 %v693
  %733 = vmatprep.subr.mxu0 0.0
  %734 = vmatpush2.msra.mxu0 0.0
  %735 = vmatprep.subr.mxu0 0.0
  %736 = vmatpush2.msra.mxu0 0.0
  %737 = vmatprep.subr.mxu0 0.0
  %738 = vmatpush2.msra.mxu0 0.0
  %739 = vmatprep.subr.mxu0 0.0
  %740 = vmatpush2.msra.mxu0 0.0
  %741 = vmatprep.subr.mxu0 0.0
  %742 = vmatpush2.msra.mxu0 0.0
  %743 = vmatprep.subr.mxu0 0.0
  %744 = vmatpush2.msra.mxu0 0.0
  %745 = vmatprep.subr.mxu0 0.0
  %746 = vmatpush2.msra.mxu0 0.0
  %747 = vmatprep.subr.mxu0 0.0
  %748 = vmatpush2.msra.mxu0 0.0
  %749 = vmatprep.subr.mxu0 0.0
  %750 = vmatpush2.msra.mxu0 0.0
  %751 = vmatprep.subr.mxu0 0.0
  %752 = vmatpush2.msra.mxu0 0.0
  %753 = vmatprep.subr.mxu0 0.0
  %754 = vmatpush2.msra.mxu0 0.0
  %755 = vmatprep.subr.mxu0 0.0
  %756 = vmatpush2.msra.mxu0 0.0
  %757 = vmatprep.subr.mxu0 0.0
  %758 = vmatpush2.msra.mxu0 0.0
  %759 = vmatprep.subr.mxu0 0.0
  %760 = vmatpush2.msra.mxu0 0.0
  %761 = vmatprep.subr.mxu0 0.0
  %762 = vmatpush2.msra.mxu0 0.0
  %763 = vmatprep.subr.mxu0 0.0
  %764 = vmatpush2.msra.mxu0 0.0
  %765 = vmatprep.mubr.f32.mxu0 0.0
  %766 = vmatmul.mubr.f32.gmra.mxu0 %v699
  %v767 = vpop.f32.mrf.mxu0
  %v768 = vadd.f32 0.0, %v767
  %v769 = vpop.f32.mrf.mxu0
  %770 = vdwg.mxu0
  %v771 = vld [vmem:[%s7] sm:$0x3]
  %v772 = vld [vmem:[%s9] sm:$0x1]
  %v774 = vlaneseq
  %v775 = vshrl.u32 %v774, 7
  %v776 = vsub.s32 0, %v775
  %v777 = vrot.slane %v772, %v776
  %v780 = vsel %vm684, %v771, 0
  %782 = vmatprep.subr.mxu0 0.0
  %783 = vmatpush1.msra.mxu0 0.0
  %784 = vmatprep.subr.mxu0 0.0
  %785 = vmatpush1.msra.mxu0 0.0
  %786 = vmatprep.subr.mxu0 0.0
  %787 = vmatpush1.msra.mxu0 0.0
  %788 = vmatprep.subr.mxu0 0.0
  %789 = vmatpush1.msra.mxu0 0.0
  %790 = vmatprep.subr.mxu0 0.0
  %791 = vmatpush1.msra.mxu0 0.0
  %792 = vmatprep.subr.mxu0 0.0
  %793 = vmatpush1.msra.mxu0 0.0
  %794 = vmatprep.subr.mxu0 0.0
  %795 = vmatpush1.msra.mxu0 0.0
  %796 = vmatprep.subr.mxu0 0.0
  %797 = vmatpush1.msra.mxu0 0.0
  %798 = vmatprep.subr.mxu0 0.0
  %799 = vmatpush1.msra.mxu0 0.0
  %800 = vmatprep.subr.mxu0 0.0
  %801 = vmatpush1.msra.mxu0 0.0
  %802 = vmatprep.subr.mxu0 0.0
  %803 = vmatpush1.msra.mxu0 0.0
  %804 = vmatprep.subr.mxu0 0.0
  %805 = vmatpush1.msra.mxu0 0.0
  %806 = vmatprep.subr.mxu0 0.0
  %807 = vmatpush1.msra.mxu0 0.0
  %808 = vmatprep.subr.mxu0 0.0
  %809 = vmatpush1.msra.mxu0 0.0
  %810 = vmatprep.subr.mxu0 0.0
  %811 = vmatpush1.msra.mxu0 0.0
  %812 = vmatprep.subr.mxu0 0.0
  %813 = vmatpush1.msra.mxu0 %v768
  %814 = vmatprep.subr.mxu0 0.0
  %815 = vmatpush2.msra.mxu0 0.0
  %816 = vmatprep.subr.mxu0 0.0
  %817 = vmatpush2.msra.mxu0 0.0
  %818 = vmatprep.subr.mxu0 0.0
  %819 = vmatpush2.msra.mxu0 0.0
  %820 = vmatprep.subr.mxu0 0.0
  %821 = vmatpush2.msra.mxu0 0.0
  %822 = vmatprep.subr.mxu0 0.0
  %823 = vmatpush2.msra.mxu0 0.0
  %824 = vmatprep.subr.mxu0 0.0
  %825 = vmatpush2.msra.mxu0 0.0
  %826 = vmatprep.subr.mxu0 0.0
  %827 = vmatpush2.msra.mxu0 0.0
  %828 = vmatprep.subr.mxu0 0.0
  %829 = vmatpush2.msra.mxu0 0.0
  %830 = vmatprep.subr.mxu0 0.0
  %831 = vmatpush2.msra.mxu0 0.0
  %832 = vmatprep.subr.mxu0 0.0
  %833 = vmatpush2.msra.mxu0 0.0
  %834 = vmatprep.subr.mxu0 0.0
  %835 = vmatpush2.msra.mxu0 0.0
  %836 = vmatprep.subr.mxu0 0.0
  %837 = vmatpush2.msra.mxu0 0.0
  %838 = vmatprep.subr.mxu0 0.0
  %839 = vmatpush2.msra.mxu0 0.0
  %840 = vmatprep.subr.mxu0 0.0
  %841 = vmatpush2.msra.mxu0 0.0
  %842 = vmatprep.subr.mxu0 0.0
  %843 = vmatpush2.msra.mxu0 0.0
  %844 = vmatprep.subr.mxu0 0.0
  %845 = vmatpush2.msra.mxu0 0.0
  %846 = vmatprep.mubr.f32.mxu0 0.0
  %847 = vmatmul.mubr.f32.gmra.mxu0 %v780
  %v848 = vpop.f32.mrf.mxu0
  %v849 = vadd.f32 %v777, %v848
  %v850 = vpop.f32.mrf.mxu0
  %851 = vdwg.mxu0
  %v852 = vtanh.pop %v849
  %v853 = vld [vmem:[%s10] sm:$0xff]
  %v854 = vld [vmem:[%s10 + $0x8] sm:$0xff]
  %v855 = vld [vmem:[#allocation2] sm:$0x1]
  %v857 = vlaneseq
  %v858 = vshrl.u32 %v857, 7
  %v859 = vsub.s32 0, %v858
  %v860 = vrot.slane %v855, %v859
  %v863 = vsel %vm56, %v852, 0
  %865 = vmatprep.subr.mxu0 0.0
  %866 = vmatpush1.msra.mxu0 0.0
  %867 = vmatprep.subr.mxu0 0.0
  %868 = vmatpush1.msra.mxu0 0.0
  %869 = vmatprep.subr.mxu0 0.0
  %870 = vmatpush1.msra.mxu0 0.0
  %871 = vmatprep.subr.mxu0 0.0
  %872 = vmatpush1.msra.mxu0 0.0
  %873 = vmatprep.subr.mxu0 0.0
  %874 = vmatpush1.msra.mxu0 0.0
  %875 = vmatprep.subr.mxu0 0.0
  %876 = vmatpush1.msra.mxu0 0.0
  %877 = vmatprep.subr.mxu0 0.0
  %878 = vmatpush1.msra.mxu0 0.0
  %879 = vmatprep.subr.mxu0 0.0
  %880 = vmatpush1.msra.mxu0 0.0
  %881 = vmatprep.subr.mxu0 0.0
  %882 = vmatpush1.msra.mxu0 0.0
  %883 = vmatprep.subr.mxu0 0.0
  %884 = vmatpush1.msra.mxu0 0.0
  %885 = vmatprep.subr.mxu0 0.0
  %886 = vmatpush1.msra.mxu0 0.0
  %887 = vmatprep.subr.mxu0 0.0
  %888 = vmatpush1.msra.mxu0 0.0
  %889 = vmatprep.subr.mxu0 0.0
  %890 = vmatpush1.msra.mxu0 0.0
  %891 = vmatprep.subr.mxu0 0.0
  %892 = vmatpush1.msra.mxu0 0.0
  %893 = vmatprep.subr.mxu0 0.0
  %894 = vmatpush1.msra.mxu0 %v854
  %895 = vmatprep.subr.mxu0 0.0
  %896 = vmatpush1.msra.mxu0 %v853
  %897 = vmatprep.subr.mxu0 0.0
  %898 = vmatpush2.msra.mxu0 0.0
  %899 = vmatprep.subr.mxu0 0.0
  %900 = vmatpush2.msra.mxu0 0.0
  %901 = vmatprep.subr.mxu0 0.0
  %902 = vmatpush2.msra.mxu0 0.0
  %903 = vmatprep.subr.mxu0 0.0
  %904 = vmatpush2.msra.mxu0 0.0
  %905 = vmatprep.subr.mxu0 0.0
  %906 = vmatpush2.msra.mxu0 0.0
  %907 = vmatprep.subr.mxu0 0.0
  %908 = vmatpush2.msra.mxu0 0.0
  %909 = vmatprep.subr.mxu0 0.0
  %910 = vmatpush2.msra.mxu0 0.0
  %911 = vmatprep.subr.mxu0 0.0
  %912 = vmatpush2.msra.mxu0 0.0
  %913 = vmatprep.subr.mxu0 0.0
  %914 = vmatpush2.msra.mxu0 0.0
  %915 = vmatprep.subr.mxu0 0.0
  %916 = vmatpush2.msra.mxu0 0.0
  %917 = vmatprep.subr.mxu0 0.0
  %918 = vmatpush2.msra.mxu0 0.0
  %919 = vmatprep.subr.mxu0 0.0
  %920 = vmatpush2.msra.mxu0 0.0
  %921 = vmatprep.subr.mxu0 0.0
  %922 = vmatpush2.msra.mxu0 0.0
  %923 = vmatprep.subr.mxu0 0.0
  %924 = vmatpush2.msra.mxu0 0.0
  %925 = vmatprep.subr.mxu0 0.0
  %926 = vmatpush2.msra.mxu0 0.0
  %927 = vmatprep.subr.mxu0 0.0
  %928 = vmatpush2.msra.mxu0 0.0
  %929 = vmatprep.mubr.f32.mxu0 0.0
  %930 = vmatmul.mubr.f32.gmra.mxu0 %v863
  %v931 = vpop.f32.mrf.mxu0
  %v932 = vadd.f32 %v860, %v931
  %v933 = vpop.f32.mrf.mxu0
  %934 = vdwg.mxu0
  %vm935 = vcmask 1024
  %936 = vst.msk [vmem:[%s12] sm:$0x3] %vm935, %v932
  // Predicated region
  $region50: #{_little_forward.1} parent=0 // pred_check
    _
  $region51: #{_little_forward.1} parent=0 // pred_check_branch
    %938 = sbr.rel (0) target = $region53
  $region52: #{_little_forward.1} parent=0 // pred_region
    _
  $region53: #{_little_forward.1} parent=0 // pred_fallthru
    _
  // Predicated region
  $region54: #{_little_forward.1} parent=0 // pred_check
    _
  $region55: #{_little_forward.1} parent=0 // pred_check_branch
    %940 = sbr.rel (0) target = $region57
  $region56: #{_little_forward.1} parent=0 // pred_region
    _
  $region57: #{_little_forward.1} parent=0 // pred_fallthru
    _

</llo_original>
